<compile_context>
chip_gen: v5e
topology: v5e:2x2
jax: 0.10.0
libtpu: 0.0.40
codegen_flags: <defaults>
</compile_context>

<pallas_src>
import math
import jax
import jax.numpy as jnp
from jax.experimental import pallas as pl
from jax.experimental.pallas import tpu as pltpu


def _vmem_limit_bytes(per_step_block_bytes):
    # 2x for double buffering + headroom for compiler-internal scratch.
    # Never below the common 32 MiB scoped default, never above what is safe
    # on v7x's 64 MiB physical VMEM.
    want = 2 * per_step_block_bytes + (4 << 20)
    return int(min(max(want, 32 << 20), 48 << 20))


# ---------------------------------------------------------------------------
# Kernel 1: dense linear layer  y = x @ W + b
#   x tiled over rows (TILE_M), W (d_in, d_out) and b (1, d_out) stay resident.
# ---------------------------------------------------------------------------
def _linear_kernel(x_ref, w_ref, b_ref, o_ref):
    acc = jnp.dot(x_ref[...], w_ref[...], preferred_element_type=jnp.float32)
    o_ref[...] = (acc + b_ref[...]).astype(o_ref.dtype)


def pallas_linear(x2d, w_t, b_row, *, tile_m=256):
    """x2d: (N, d_in); w_t: (d_in, d_out) (already transposed); b_row: (1, d_out)."""
    n, d_in = x2d.shape
    d_out = w_t.shape[1]
    tm = min(tile_m, n)                 # partial last tile is fine (masked store)
    grid = (pl.cdiv(n, tm),)

    itemsize = x2d.dtype.itemsize
    block_bytes = (tm * d_in + d_in * d_out + d_out) * itemsize + tm * d_out * 4
    flops = 2 * n * d_in * d_out
    bytes_accessed = (n * d_in + d_in * d_out + d_out) * itemsize + n * d_out * 4

    return pl.pallas_call(
        _linear_kernel,
        out_shape=jax.ShapeDtypeStruct((n, d_out), jnp.float32),
        grid=grid,
        in_specs=[
            pl.BlockSpec((tm, d_in), lambda i: (i, 0)),      # activations: row tiles
            pl.BlockSpec((d_in, d_out), lambda i: (0, 0)),   # weight: resident
            pl.BlockSpec((1, d_out), lambda i: (0, 0)),      # bias: resident
        ],
        out_specs=pl.BlockSpec((tm, d_out), lambda i: (i, 0)),
        compiler_params=pltpu.CompilerParams(
            dimension_semantics=("parallel",),
            vmem_limit_bytes=_vmem_limit_bytes(block_bytes)),
        cost_estimate=pl.CostEstimate(flops=int(flops), transcendentals=0,
                                      bytes_accessed=int(bytes_accessed)),
    )(x2d, w_t, b_row)


# ---------------------------------------------------------------------------
# Kernel 2: all-head scaled-dot-product attention + fused output projection.
#   grid = (batch, q_tile); both axes "parallel" (every grid point owns a
#   disjoint output block).  The 1/sqrt(d_k) scale is pre-folded into Q.
# ---------------------------------------------------------------------------
def _attn_body(q_ref, k_ref, v_ref, wo_ref, bo_ref, m_ref, o_ref, amean_ref):
    q = q_ref[0]                       # (h, TQ,  d_k)  (already scaled)
    k = k_ref[0]                       # (h, S_k, d_k)
    v = v_ref[0]                       # (h, S_k, d_k)
    nh = q.shape[0]

    # q @ k^T for all heads at once (batched over the head axis, contract d_k).
    scores = jnp.einsum('hqd,hkd->hqk', q, k,
                        preferred_element_type=jnp.float32)        # (h, TQ, S_k)
    if m_ref is not None:
        scores = jnp.where(m_ref[0][None, :, :] == 0,
                           jnp.float32(-1.0e9), scores)

    # numerically stable softmax along the last axis
    m_row = jnp.max(scores, axis=-1, keepdims=True)
    e = jnp.exp(scores - m_row)
    denom = jnp.sum(e, axis=-1, keepdims=True)
    p_attn = e * pl.reciprocal(denom, approx=False)                # (h, TQ, S_k)

    # mean over heads of p_attn (second return value of the module)
    amean_ref[0] = (jnp.sum(p_attn, axis=0) * (1.0 / nh)).astype(amean_ref.dtype)

    # attended values for all heads
    x = jnp.einsum('hqk,hkd->hqd', p_attn.astype(v.dtype), v,
                   preferred_element_type=jnp.float32)             # (h, TQ, d_k)

    # fused output projection: out = sum_h x_h @ W_o[h] + b_o  (static unroll)
    acc = jnp.zeros((q.shape[1], wo_ref.shape[2]), jnp.float32)    # (TQ, d_model)
    for hh in range(nh):
        acc = acc + jnp.dot(x[hh].astype(wo_ref.dtype), wo_ref[hh],
                            preferred_element_type=jnp.float32)
    o_ref[0] = (acc + bo_ref[...]).astype(o_ref.dtype)


def _attn_kernel_nomask(q_ref, k_ref, v_ref, wo_ref, bo_ref, o_ref, amean_ref):
    _attn_body(q_ref, k_ref, v_ref, wo_ref, bo_ref, None, o_ref, amean_ref)


def _attn_kernel_masked(q_ref, k_ref, v_ref, wo_ref, bo_ref, m_ref, o_ref,
                        amean_ref):
    _attn_body(q_ref, k_ref, v_ref, wo_ref, bo_ref, m_ref, o_ref, amean_ref)


def pallas_attention_proj(q, k, v, wo_heads, b_o, mask_i8=None, *, tile_q=256):
    """q: (B,h,S_q,d_k); k,v: (B,h,S_k,d_k); wo_heads: (h,d_k,d_model);
    b_o: (1,d_model); mask_i8: optional (B,S_q,S_k) int8.
    Returns (out (B,S_q,d_model) f32, attn_mean (B,S_q,S_k) f32)."""
    b, h, s_q, d_k = q.shape
    s_k = k.shape[2]
    d_model = wo_heads.shape[2]
    tq = min(tile_q, s_q)
    grid = (b, pl.cdiv(s_q, tq))

    q_spec = pl.BlockSpec((1, h, tq, d_k), lambda bi, qi: (bi, 0, qi, 0))
    kv_spec = pl.BlockSpec((1, h, s_k, d_k), lambda bi, qi: (bi, 0, 0, 0))
    wo_spec = pl.BlockSpec((h, d_k, d_model), lambda bi, qi: (0, 0, 0))
    bo_spec = pl.BlockSpec((1, d_model), lambda bi, qi: (0, 0))
    o_spec = pl.BlockSpec((1, tq, d_model), lambda bi, qi: (bi, qi, 0))
    amean_spec = pl.BlockSpec((1, tq, s_k), lambda bi, qi: (bi, qi, 0))

    out_shapes = (
        jax.ShapeDtypeStruct((b, s_q, d_model), jnp.float32),  # projected output
        jax.ShapeDtypeStruct((b, s_q, s_k), jnp.float32),      # mean over heads
    )

    itemsize = q.dtype.itemsize
    flops = 4 * b * h * s_q * s_k * d_k + 2 * b * s_q * d_model * d_model
    transcendentals = b * h * s_q * s_k
    bytes_accessed = (itemsize * (b * h * s_q * d_k + 2 * b * h * s_k * d_k
                                  + h * d_k * d_model + d_model)
                      + 4 * (b * s_q * d_model + b * s_q * s_k)
                      + (b * s_q * s_k if mask_i8 is not None else 0))

    block_bytes = (itemsize * (h * tq * d_k + 2 * h * s_k * d_k
                               + h * d_k * d_model + d_model)
                   + 4 * (tq * d_model + tq * s_k)
                   + 4 * (3 * h * tq * s_k + h * tq * d_k + tq * d_model)
                   + (tq * s_k if mask_i8 is not None else 0))

    if mask_i8 is None:
        kernel = _attn_kernel_nomask
        in_specs = [q_spec, kv_spec, kv_spec, wo_spec, bo_spec]
        args = (q, k, v, wo_heads, b_o)
    else:
        kernel = _attn_kernel_masked
        mask_spec = pl.BlockSpec((1, tq, s_k), lambda bi, qi: (bi, qi, 0))
        in_specs = [q_spec, kv_spec, kv_spec, wo_spec, bo_spec, mask_spec]
        args = (q, k, v, wo_heads, b_o, mask_i8)

    return pl.pallas_call(
        kernel,
        out_shape=out_shapes,
        grid=grid,
        in_specs=in_specs,
        out_specs=(o_spec, amean_spec),
        compiler_params=pltpu.CompilerParams(
            dimension_semantics=("parallel", "parallel"),
            vmem_limit_bytes=_vmem_limit_bytes(block_bytes)),
        cost_estimate=pl.CostEstimate(flops=int(flops),
                                      transcendentals=int(transcendentals),
                                      bytes_accessed=int(bytes_accessed)),
    )(*args)


# ---------------------------------------------------------------------------
# Module wrapper
# ---------------------------------------------------------------------------
class MultiHeadedAttentionPallas:
    def __init__(self, h, d_model, key, compute_dtype=jnp.float32):
        assert d_model % h == 0
        self.h = h
        self.d_model = d_model
        self.d_k = d_model // h
        self.compute_dtype = compute_dtype   # set jnp.bfloat16 to feed MXU bf16

        # 4 Linear(d_model, d_model) layers, PyTorch default init.
        bound = 1.0 / math.sqrt(d_model)
        keys = jax.random.split(key, 8)
        self.weights, self.biases = [], []
        for i in range(4):
            w = jax.random.uniform(keys[2 * i], (d_model, d_model),
                                   jnp.float32, -bound, bound)
            bb = jax.random.uniform(keys[2 * i + 1], (d_model,),
                                    jnp.float32, -bound, bound)
            self.weights.append(w)
            self.biases.append(bb)

        # Kernel-side parameters: pre-transposed to (d_in, d_out), with the
        # 1/sqrt(d_k) attention scale folded into the Q projection (exact:
        # (q/sqrt(d_k)) @ k^T == (q @ k^T) / sqrt(d_k)).
        inv_sqrt_dk = 1.0 / math.sqrt(self.d_k)
        cdt = compute_dtype
        self.w_q_t = (self.weights[0] * inv_sqrt_dk).T.astype(cdt)
        self.w_k_t = self.weights[1].T.astype(cdt)
        self.w_v_t = self.weights[2].T.astype(cdt)
        self.w_o_t = self.weights[3].T.astype(cdt)            # (d_in, d_out)
        self.b_q = (self.biases[0] * inv_sqrt_dk).reshape(1, -1)
        self.b_k = self.biases[1].reshape(1, -1)
        self.b_v = self.biases[2].reshape(1, -1)
        self.b_o = self.biases[3].reshape(1, -1)
        # Fused QKV weight for the self-attention path (x read from HBM once).
        self.w_qkv_t = jnp.concatenate([self.w_q_t, self.w_k_t, self.w_v_t], axis=1)
        self.b_qkv = jnp.concatenate([self.b_q, self.b_k, self.b_v], axis=1)
        # Per-head slices of the output projection (for the fused attention+proj
        # kernel): row block h*d_k + d of W_o^T multiplies head h, feature d.
        self.w_o_heads = self.w_o_t.reshape(self.h, self.d_k, d_model)

    def __call__(self, query, key, value, mask=None):
        b, s_q, d_model = query.shape
        s_k = key.shape[1]
        h, d_k = self.h, self.d_k
        cdt = self.compute_dtype

        if (query is key) and (key is value):
            # Fused QKV projection: one tiled pallas_call, activations read once.
            x2d = query.reshape(b * s_q, d_model).astype(cdt)
            qkv = pallas_linear(x2d, self.w_qkv_t, self.b_qkv)        # (N, 3*d_model)
            q2d = qkv[:, :d_model]
            k2d = qkv[:, d_model:2 * d_model]
            v2d = qkv[:, 2 * d_model:]
        else:
            q2d = pallas_linear(query.reshape(b * s_q, d_model).astype(cdt),
                                self.w_q_t, self.b_q)
            k2d = pallas_linear(key.reshape(b * s_k, d_model).astype(cdt),
                                self.w_k_t, self.b_k)
            v2d = pallas_linear(value.reshape(b * s_k, d_model).astype(cdt),
                                self.w_v_t, self.b_v)

        # view(B, -1, h, d_k).transpose(1, 2) -> (B, h, S, d_k)
        q = jnp.transpose(q2d.reshape(b, s_q, h, d_k), (0, 2, 1, 3)).astype(cdt)
        k = jnp.transpose(k2d.reshape(b, s_k, h, d_k), (0, 2, 1, 3)).astype(cdt)
        v = jnp.transpose(v2d.reshape(b, s_k, h, d_k), (0, 2, 1, 3)).astype(cdt)

        if mask is None:
            out, attn_mean = pallas_attention_proj(
                q, k, v, self.w_o_heads, self.b_o, None)
        else:
            mask_i8 = jnp.broadcast_to(mask != 0, (b, s_q, s_k)).astype(jnp.int8)
            out, attn_mean = pallas_attention_proj(
                q, k, v, self.w_o_heads, self.b_o, mask_i8)

        return out, attn_mean


# ---------------------------------------------------------------------------
# Pure-JAX reference (uses the original un-fused / un-scaled weights)
# ---------------------------------------------------------------------------
def reference_forward(mod, query, key, value, mask=None):
    b, s, d_model = query.shape
    h, d_k = mod.h, mod.d_k

    def lin(x, w, bb):
        return x @ w.T + bb

    def proj(x, i):
        y = lin(x, mod.weights[i], mod.biases[i])
        return jnp.transpose(y.reshape(b, -1, h, d_k), (0, 2, 1, 3))

    q, k, v = proj(query, 0), proj(key, 1), proj(value, 2)
    scores = jnp.einsum("bhqd,bhkd->bhqk", q, k) / math.sqrt(d_k)
    if mask is not None:
        scores = jnp.where(mask[:, None, :, :] == 0, -1.0e9, scores)
    p = jax.nn.softmax(scores, axis=-1)
    x = jnp.einsum("bhqk,bhkd->bhqd", p, v)
    x = jnp.transpose(x, (0, 2, 1, 3)).reshape(b, -1, h * d_k)
    return lin(x, mod.weights[3], mod.biases[3]), jnp.mean(p, axis=1)


if __name__ == "__main__":
    B, S, H, D_MODEL = 2, 8, 4, 32

    root = jax.random.PRNGKey(0)
    k_param, k_q, k_k, k_v, k_m = jax.random.split(root, 5)

    mod = MultiHeadedAttentionPallas(H, D_MODEL, k_param)

    query = jax.random.normal(k_q, (B, S, D_MODEL), jnp.float32)
    key = jax.random.normal(k_k, (B, S, D_MODEL), jnp.float32)
    value = jax.random.normal(k_v, (B, S, D_MODEL), jnp.float32)

    # Path 1: self-attention (fused QKV projection), no mask -> mask-free kernel.
    out_sa, attn_sa = mod(query, query, query, mask=None)

    # Path 2: distinct q/k/v with a real mask -> masked kernel, int8 mask.
    mask = (jax.random.uniform(k_m, (B, S, S)) > 0.3).astype(jnp.float32)
    mask = mask.at[:, :, 0].set(1.0)   # ensure no fully-masked row
    out_m, attn_m = mod(query, key, value, mask=mask)

    jax.block_until_ready((out_sa, attn_sa, out_m, attn_m))

    ref_sa, ref_attn_sa = reference_forward(mod, query, query, query, None)
    ref_m, ref_attn_m = reference_forward(mod, query, key, value, mask)

    assert out_sa.shape == (B, S, D_MODEL) and attn_sa.shape == (B, S, S)
    assert out_m.shape == (B, S, D_MODEL) and attn_m.shape == (B, S, S)
    assert jnp.allclose(out_sa, ref_sa, atol=1e-4, rtol=1e-4)
    assert jnp.allclose(attn_sa, ref_attn_sa, atol=2e-5, rtol=1e-4)
    assert jnp.allclose(out_m, ref_m, atol=1e-4, rtol=1e-4)
    assert jnp.allclose(attn_m, ref_attn_m, atol=2e-5, rtol=1e-4)

    print("KERNEL_OK")
</pallas_src>

<mosaic_0001>
module attributes {stable_mosaic.version = 11 : i64} {
  func.func @_linear_kernel(%arg0: i32, %arg1: memref<16x32xf32, #tpu.memory_space<vmem>>, %arg2: memref<32x96xf32, #tpu.memory_space<vmem>>, %arg3: memref<1x96xf32, #tpu.memory_space<vmem>>, %arg4: memref<16x96xf32, #tpu.memory_space<vmem>>) attributes {dimension_semantics = [#tpu.dimension_semantics<parallel>], iteration_bounds = array<i64: 1>, scalar_prefetch = 0 : i64, scratch_operands = 0 : i64, tpu.core_type = #tpu.core_type<tc>, window_params = [{transform_indices = @transform_0, window_bounds = array<i64: 16, 32>}, {pipeline_mode = #tpu.pipeline_mode<synchronous>, transform_indices = @transform_1, window_bounds = array<i64: 32, 96>}, {pipeline_mode = #tpu.pipeline_mode<synchronous>, transform_indices = @transform_2, window_bounds = array<i64: 1, 96>}, {transform_indices = @transform_3, window_bounds = array<i64: 16, 96>}]} {
    %c0 = arith.constant 0 : index
    %c0_0 = arith.constant 0 : index
    %0 = vector.load %arg1[%c0, %c0_0] : memref<16x32xf32, #tpu.memory_space<vmem>>, vector<16x32xf32>
    %c0_1 = arith.constant 0 : index
    %c0_2 = arith.constant 0 : index
    %1 = vector.load %arg2[%c0_1, %c0_2] : memref<32x96xf32, #tpu.memory_space<vmem>>, vector<32x96xf32>
    %cst = arith.constant dense<0.000000e+00> : vector<16x96xf32>
    %2 = tpu.matmul %0, %1, %cst {dimension_numbers = #tpu.dot_dimension_numbers<[1], [0], [0], [1], [0, 0, 1, 1], [], []>} : vector<16x32xf32>, vector<32x96xf32>, vector<16x96xf32> -> vector<16x96xf32>
    %c0_3 = arith.constant 0 : index
    %c0_4 = arith.constant 0 : index
    %3 = vector.load %arg3[%c0_3, %c0_4] : memref<1x96xf32, #tpu.memory_space<vmem>>, vector<1x96xf32>
    %4 = vector.broadcast %3 : vector<1x96xf32> to vector<16x96xf32>
    %5 = arith.addf %2, %4 : vector<16x96xf32>
    %c0_5 = arith.constant 0 : index
    %c0_6 = arith.constant 0 : index
    %6 = vector.load %arg4[%c0_5, %c0_6] : memref<16x96xf32, #tpu.memory_space<vmem>>, vector<16x96xf32>
    tpu.vector_store %arg4[%c0_5, %c0_6], %5 {strides = array<i32>} : memref<16x96xf32, #tpu.memory_space<vmem>>, vector<16x96xf32>,
    return
  }
  func.func @transform_0(%arg0: i32) -> (i32, i32) {
    %c0_i32 = arith.constant 0 : i32
    %c0_i32_0 = arith.constant 0 : i32
    return %arg0, %c0_i32 : i32, i32
  }
  func.func @transform_1(%arg0: i32) -> (i32, i32) {
    %c0_i32 = arith.constant 0 : i32
    %c0_i32_0 = arith.constant 0 : i32
    %c0_i32_1 = arith.constant 0 : i32
    return %c0_i32, %c0_i32_0 : i32, i32
  }
  func.func @transform_2(%arg0: i32) -> (i32, i32) {
    %c0_i32 = arith.constant 0 : i32
    %c0_i32_0 = arith.constant 0 : i32
    %c0_i32_1 = arith.constant 0 : i32
    return %c0_i32, %c0_i32_0 : i32, i32
  }
  func.func @transform_3(%arg0: i32) -> (i32, i32) {
    %c0_i32 = arith.constant 0 : i32
    %c0_i32_0 = arith.constant 0 : i32
    return %arg0, %c0_i32 : i32, i32
  }
}

</mosaic_0001>

<llo_original>
// kernel: tpu_custom_call.1
$region0: #{tpu_custom_call.1}
  #allocation0 [shape = 'u32[]', space=smem, size = 0x4, offset = 0x4, fixed_abs, tag = 'smem constant byte address 0x4 - core index']
  #allocation1 [shape = 'u32[72,128]{1,0:T(1,128)}', space=vmem, size = 0x9000, scoped, tag = 'internal scratch']
  %s0 = inlined_call_operand.hbm [shape: f32[16,32], index: 0, kind: input, shape index: {}]
  %s1 = inlined_call_operand.hbm [shape: f32[32,96], index: 1, kind: input, shape index: {}]
  %s2 = inlined_call_operand.vmem [shape: f32[1,96], index: 2, kind: input, shape index: {}]
  %s3 = inlined_call_operand.hbm [shape: f32[16,96], index: 3, kind: output, shape index: {}]
  %s4 = sld [smem:[#allocation0]]
  $region30: #{tpu_custom_call.1} parent=0
    _
  %s6 = ssub.s32 1, %s4
  %s7 = scalar_select 0, %s6, %s4
  $region1: #{tpu_custom_call.1} parent=0
    #allocation2 [shape = 'u8[8192]{0}', space=vmem, size = 0x2000, scoped, tag = 'input window, operand 0, single buffered']
    #allocation3 [shape = 's32[1]{0}', space=sflag, size = 0x4, scoped, tag = 'scoped memory for tpu_custom_call.1']
    #allocation4 [shape = 's32[1]{0}', space=sflag, size = 0x4, scoped, tag = 'scoped memory for tpu_custom_call.1']
    #allocation5 [shape = 'u8[16384]{0}', space=vmem, size = 0x4000, scoped, tag = 'input window, operand 1, single buffered']
    #allocation6 [shape = 's32[1]{0}', space=sflag, size = 0x4, scoped, tag = 'scoped memory for tpu_custom_call.1']
    #allocation7 [shape = 'u8[8192]{0}', space=vmem, size = 0x2000, scoped, tag = 'output window, operand 0, single buffered']
    %8 = vsyncpa [#allocation3], 0
    %9 = vsyncpa [#allocation6], 0
    %10 = vsyncpa [#allocation4], 0
    // Predicated region
    $region2: #{tpu_custom_call.1} parent=1 // pred_check
      _
    $region3: #{tpu_custom_call.1} parent=1 // pred_check_branch
      %12 = sbr.rel (0) target = $region5
    $region4: #{tpu_custom_call.1} parent=1 // pred_region
      %14 = vsyncadd [#allocation3], 0
      %s15 = sshll.u32 %s0, 4
      %s16 = int_to_ptr.hbm [resolvable:$true] %s15
      %s17 = sshll.u32 [#allocation2], 4
      %s18 = int_to_ptr.vmem [resolvable:$true] %s17
      %23 = dma.hbm_to_vmem [thread:$0]  %s16, 256, %s18, [#allocation3], 128, 128, 8
    $region5: #{tpu_custom_call.1} parent=1 // pred_fallthru
      _
    // Predicated region
    $region6: #{tpu_custom_call.1} parent=1 // pred_check
      _
    $region7: #{tpu_custom_call.1} parent=1 // pred_check_branch
      %25 = sbr.rel (0) target = $region9
    $region8: #{tpu_custom_call.1} parent=1 // pred_region
      %27 = vsyncadd [#allocation6], 0
      %s28 = sshll.u32 %s1, 4
      %s29 = int_to_ptr.hbm [resolvable:$true] %s28
      %s30 = sshll.u32 [#allocation5], 4
      %s31 = int_to_ptr.vmem [resolvable:$true] %s30
      %36 = dma.hbm_to_vmem [thread:$0]  %s29, 512, %s31, [#allocation6], 128, 128, 8
    $region9: #{tpu_custom_call.1} parent=1 // pred_fallthru
      _
    // Predicated region
    $region10: #{tpu_custom_call.1} parent=1 // pred_check
      _
    $region11: #{tpu_custom_call.1} parent=1 // pred_check_branch
      %38 = sbr.rel (0) target = $region13
    $region12: #{tpu_custom_call.1} parent=1 // pred_region
      _
    $region13: #{tpu_custom_call.1} parent=1 // pred_fallthru
      _
    // Predicated region
    $region14: #{tpu_custom_call.1} parent=1 // pred_check
      _
    $region15: #{tpu_custom_call.1} parent=1 // pred_check_branch
      %40 = sbr.rel (0) target = $region17
    $region16: #{tpu_custom_call.1} parent=1 // pred_region
      %42 = dma.done [#allocation3], 256
    $region17: #{tpu_custom_call.1} parent=1 // pred_fallthru
      _
    // Predicated region
    $region18: #{tpu_custom_call.1} parent=1 // pred_check
      _
    $region19: #{tpu_custom_call.1} parent=1 // pred_check_branch
      %44 = sbr.rel (0) target = $region21
    $region20: #{tpu_custom_call.1} parent=1 // pred_region
      %46 = dma.done [#allocation6], 512
    $region21: #{tpu_custom_call.1} parent=1 // pred_fallthru
      _
    %v47 = vld [vmem:[#allocation2] sm:$0xff]
    %v48 = vld [vmem:[#allocation2 + $0x8] sm:$0xff]
    %v49 = vld [vmem:[#allocation5] sm:$0xff]
    %v50 = vld [vmem:[#allocation5 + $0x8] sm:$0xff]
    %v51 = vld [vmem:[#allocation5 + $0x10] sm:$0xff]
    %v52 = vld [vmem:[#allocation5 + $0x18] sm:$0xff]
    %v53 = vld [vmem:[%s2] sm:$0x1]
    %v55 = vperm.slane %v53, 0
    %vm57 = vcmask 261120
    %v59 = vsel %vm57, %v47, 0
    %v62 = vsel %vm57, %v48, 0
    %64 = vmatpush.msra.mxu0 0.0
    %65 = vmatpush.msra.mxu0 0.0
    %66 = vmatpush.msra.mxu0 0.0
    %67 = vmatpush.msra.mxu0 0.0
    %68 = vmatpush.msra.mxu0 0.0
    %69 = vmatpush.msra.mxu0 0.0
    %70 = vmatpush.msra.mxu0 0.0
    %71 = vmatpush.msra.mxu0 0.0
    %72 = vmatpush.msra.mxu0 0.0
    %73 = vmatpush.msra.mxu0 0.0
    %74 = vmatpush.msra.mxu0 0.0
    %75 = vmatpush.msra.mxu0 0.0
    %76 = vmatpush.msra.mxu0 %v52
    %77 = vmatpush.msra.mxu0 %v51
    %78 = vmatpush.msra.mxu0 %v50
    %79 = vmatpush.msra.mxu0 %v49
    %80 = vmatmul.f32.gmra.mxu0 %v59
    %v81 = vpop.f32.mrf.mxu0
    %v82 = vadd.f32 %v55, %v81
    %83 = vmatmul.f32.gmra.mxu0 %v62
    %v84 = vpop.f32.mrf.mxu0
    %v85 = vadd.f32 %v55, %v84
    %86 = vdwg.mxu0
    %vm87 = vcmask 785408
    %88 = vst.msk [vmem:[#allocation7] sm:$0xff] %vm87, %v82
    %89 = vst.msk [vmem:[#allocation7 + $0x8] sm:$0xff] %vm87, %v85
    // Predicated region
    $region22: #{tpu_custom_call.1} parent=1 // pred_check
      _
    $region23: #{tpu_custom_call.1} parent=1 // pred_check_branch
      %91 = sbr.rel (0) target = $region25
    $region24: #{tpu_custom_call.1} parent=1 // pred_region
      %93 = vsyncadd [#allocation4], 0
      %s94 = sshll.u32 [#allocation7], 4
      %s95 = int_to_ptr.vmem [resolvable:$true] %s94
      %s96 = sshll.u32 %s3, 4
      %s97 = int_to_ptr.hbm [resolvable:$true] %s96
      %102 = dma.vmem_to_hbm [thread:$0]  %s95, 256, %s97, [#allocation4], 128, 128, 8
    $region25: #{tpu_custom_call.1} parent=1 // pred_fallthru
      _
    // Predicated region
    $region26: #{tpu_custom_call.1} parent=1 // pred_check
      _
    $region27: #{tpu_custom_call.1} parent=1 // pred_check_branch
      %104 = sbr.rel (0) target = $region29
    $region28: #{tpu_custom_call.1} parent=1 // pred_region
      %106 = dma.done [#allocation4], 256
    $region29: #{tpu_custom_call.1} parent=1 // pred_fallthru
      _
    %107 = vsyncpa [#allocation3], 1
    %108 = vsyncpa [#allocation6], 1
    %109 = vsyncpa [#allocation4], 1

</llo_original>
